<compile_context>
chip_gen: v7x
topology: tpu7x:2x2x1
jax: 0.10.0
libtpu: 0.0.40
codegen_flags: <defaults>
</compile_context>

<pallas_src>
import math

import jax
import jax.numpy as jnp
from jax.experimental import pallas as pl
from jax.experimental.pallas import tpu as pltpu

ALPHA = 0.2        # LeakyReLU negative slope
BN_EPS = 1e-5      # BatchNorm1d default eps
NEG_INF = -9e15    # same masking constant as the PyTorch code
C_PAD = 128        # lane-padded channel width used for every in-kernel slab


# ---------------------------------------------------------------------------
# Kernel
# ---------------------------------------------------------------------------
def _gat_block_fused(x, mask_bias, mask_diag, wcat, bias, gamma, beta):
    """One GATBlock (GATConv -> BatchNorm1d (batch stats) -> ReLU), lane-padded.

    x         : (B, N, C_PAD)     real channels in leading lanes, rest zero
    mask_bias : (N, N)            0 where adj>0 else NEG_INF
    mask_diag : (1, N)            diagonal of mask_bias (precomputed wrapper-side)
    wcat      : (C_PAD, 2*C_PAD)  [W0 | W1 with score cols in lanes 126/127]
    bias, gamma, beta : (1, C_PAD) zero-padded per-channel params
    returns   : (B, N, C_PAD)     padded lanes come out exactly 0 (BN scrubs them,
                                  because gamma/beta/bias are 0 in padded lanes)
    """
    B, N, _ = x.shape

    # --- one fused MXU matmul: h0, h1 and both score columns ------------------
    # reshape is a pure re-tiling (last dim is exactly 128 lanes).
    x2 = x.reshape(B * N, C_PAD)
    hcat = jnp.dot(x2, wcat, preferred_element_type=jnp.float32)
    hcat = hcat.reshape(B, N, 2 * C_PAD)

    h0 = hcat[..., :C_PAD]                                           # (B, N, C_PAD)
    # h1's lanes 126/127 carry the score values (not zeros); BatchNorm scrubs them.
    h1 = hcat[..., C_PAD:]                                           # (B, N, C_PAD)
    s_src = jnp.sum(hcat[..., 2 * C_PAD - 2:2 * C_PAD - 1], axis=-1)  # (B, N)
    s_dst = jnp.sum(hcat[..., 2 * C_PAD - 1:2 * C_PAD], axis=-1)      # (B, N)

    # --- masked LeakyReLU attention logits (mask folded in as additive bias) --
    # Rows of adj with zero neighbours degrade to a uniform softmax (all logits
    # ~NEG_INF), identical to the PyTorch reference behaviour.
    e = s_src[:, :, None] + s_dst[:, None, :]                        # (B, N, N)
    e = jnp.where(e > 0, e, ALPHA * e)                               # LeakyReLU(0.2)
    logits = e + mask_bias[None]

    # --- softmax over neighbours j (exact reciprocal: (B,N) operand, EUP saving
    # would be unmeasurable and the approximation compounded through two layers) -
    row_max = jnp.max(logits, axis=-1)                               # (B, N)
    p = jnp.exp(logits - row_max[:, :, None])                        # unnormalized
    row_sum = jnp.sum(p, axis=-1)                                    # (B, N)
    inv = 1.0 / row_sum                                              # (B, N)

    # diag(att) numerator straight from the score vectors (no att*M pass).
    d = s_src + s_dst
    d = jnp.where(d > 0, d, ALPHA * d) + mask_diag                   # (B, N)
    diag_p = jnp.exp(d - row_max)                                    # (B, N)

    # --- aggregation:  (att*M)@h0 + (att*(1-M))@h1 == att@h1 + diag(att)*(h0-h1)
    agg = jnp.einsum('bij,bjc->bic', p, h1,
                     preferred_element_type=jnp.float32)             # (B, N, C_PAD)
    hp = inv[:, :, None] * (agg + diag_p[:, :, None] * (h0 - h1)) + bias[None]

    # --- BatchNorm1d, training mode: per-channel stats over (B, N), biased var --
    hp2 = hp.reshape(B * N, C_PAD)                                   # re-tiling only
    mean = jnp.mean(hp2, axis=0, keepdims=True)                      # (1, C_PAD)
    var = jnp.mean((hp2 - mean) ** 2, axis=0, keepdims=True)         # (1, C_PAD)
    scale = gamma * jax.lax.rsqrt(var + BN_EPS)                      # EUP rsqrt
    y = (hp - mean[None]) * scale[None] + beta[None]                 # padded lanes -> 0

    return jnp.maximum(y, 0.0)                                       # ReLU


def _make_resgat_kernel(N):
    def kernel(x_ref, mb_ref, w1_ref, w2_ref, sp_ref, o_ref):
        x = x_ref[...]
        mask_bias = mb_ref[...]
        mask_diag = sp_ref[6:7, :N]                                  # (1, N), precomputed

        y1 = _gat_block_fused(x, mask_bias, mask_diag, w1_ref[...],
                              sp_ref[0:1, :], sp_ref[1:2, :], sp_ref[2:3, :])
        y2 = _gat_block_fused(y1, mask_bias, mask_diag, w2_ref[...],
                              sp_ref[3:4, :], sp_ref[4:5, :], sp_ref[5:6, :])

        # Identity residual (in_channels == out_channels). Full 128-lane dense store.
        o_ref[...] = (y2 + x).astype(o_ref.dtype)

    return kernel


# ---------------------------------------------------------------------------
# Wrapper-side packing + pallas_call
# ---------------------------------------------------------------------------
def _pack_wcat(w0, w1, a_src, a_dst):
    """(C_PAD, 2*C_PAD) slab: [ W0 | W1 with score columns in lanes 126/127 ].

    The two attention-score columns (W0+W1)@a_src and (W0+W1)@a_dst live in the
    last two lanes of the W1 block, so the fused projection yields h0, h1 and
    both score vectors in a single MXU push with only 2*C_PAD output columns.
    Requires c_out <= C_PAD - 2 (asserted); the resulting nonzero padded lanes of
    h1 are scrubbed by BatchNorm (gamma/beta/bias are zero in padded lanes).
    """
    c_in, c_out = w0.shape
    assert c_in <= C_PAD and c_out <= C_PAD - 2, "channel dims must fit 128-lane slab"
    w_sum = w0 + w1
    col_src = w_sum @ a_src.reshape(c_out, 1)                         # (c_in, 1)
    col_dst = w_sum @ a_dst.reshape(c_out, 1)                         # (c_in, 1)
    wcat = jnp.zeros((C_PAD, 2 * C_PAD), jnp.float32)
    wcat = wcat.at[:c_in, 0:c_out].set(w0)
    wcat = wcat.at[:c_in, C_PAD:C_PAD + c_out].set(w1)
    wcat = wcat.at[:c_in, 2 * C_PAD - 2:2 * C_PAD - 1].set(col_src)
    wcat = wcat.at[:c_in, 2 * C_PAD - 1:2 * C_PAD].set(col_dst)
    return wcat


def _pad_row(v):
    v = v.reshape(-1).astype(jnp.float32)
    return jnp.pad(v, (0, C_PAD - v.shape[0]))       # zero padding -> BN-scrub invariant


def resgat_forward(x, adj, params):
    """x: (B, N, C_in), adj: (N, N), params: flat dict (see _init_gat_params)."""
    B, N, c_in = x.shape
    hid = params["w10"].shape[1]
    c_out = params["w20"].shape[1]
    assert c_in == c_out, "only the identity-residual path is implemented"
    assert N <= C_PAD, "mask_diag packing assumes N <= 128"
    assert max(hid, c_out) <= C_PAD - 2 and c_in <= C_PAD

    # ---- wrapper-side packing (free XLA-side layout plumbing) ----------------
    x_pad = jnp.pad(x.astype(jnp.float32), ((0, 0), (0, 0), (0, C_PAD - c_in)))
    mask_bias = jnp.where(adj > 0, 0.0, NEG_INF).astype(jnp.float32)  # (N, N)
    mask_diag = jnp.where(jnp.diag(adj) > 0, 0.0, NEG_INF).astype(jnp.float32)  # (N,)
    wcat1 = _pack_wcat(params["w10"], params["w11"], params["as1"], params["ad1"])
    wcat2 = _pack_wcat(params["w20"], params["w21"], params["as2"], params["ad2"])
    # rows 0..5: bias/gamma/beta for the two layers; row 6: diag of mask_bias.
    small = jnp.stack([_pad_row(params["b1"]), _pad_row(params["g1"]),
                       _pad_row(params["be1"]), _pad_row(params["b2"]),
                       _pad_row(params["g2"]), _pad_row(params["be2"]),
                       _pad_row(mask_diag),
                       jnp.zeros((C_PAD,), jnp.float32)])              # (8, 128)

    args = (x_pad, mask_bias, wcat1, wcat2, small)
    in_specs = [pl.BlockSpec(a.shape, lambda i, nd=a.ndim: (0,) * nd) for a in args]
    out_spec = pl.BlockSpec((B, N, C_PAD), lambda i: (0, 0, 0))

    out = pl.pallas_call(
        _make_resgat_kernel(N),
        out_shape=jax.ShapeDtypeStruct((B, N, C_PAD), jnp.float32),
        grid=(1,),
        in_specs=in_specs,
        out_specs=out_spec,
        compiler_params=pltpu.CompilerParams(
            dimension_semantics=("arbitrary",)),
    )(*args)

    return out[..., :c_out]            # drop lane padding wrapper-side (free)


# ---------------------------------------------------------------------------
# Parameter init (deterministic, mirrors GATConv.__init__ shapes)
# ---------------------------------------------------------------------------
def _xavier_uniform(key, shape, fan_in, fan_out, gain):
    bound = gain * math.sqrt(6.0 / (fan_in + fan_out))
    return jax.random.uniform(key, shape, jnp.float32, -bound, bound)


def _init_gat_params(key, c_in, c_out):
    k_w, k_a, k_b = jax.random.split(key, 3)
    W = _xavier_uniform(k_w, (2, c_in, c_out),
                        fan_in=c_in * c_out, fan_out=2 * c_out, gain=1.414)
    a = _xavier_uniform(k_a, (2 * c_out, 1),
                        fan_in=1, fan_out=2 * c_out, gain=1.414)
    stdv = 1.0 / math.sqrt(c_out)
    bias = jax.random.uniform(k_b, (c_out,), jnp.float32, -stdv, stdv)
    return {
        "w0": W[0], "w1": W[1],
        "a_src": a[:c_out, 0].reshape(1, c_out),
        "a_dst": a[c_out:, 0].reshape(1, c_out),
        "bias": bias.reshape(1, c_out),
        "gamma": jnp.ones((1, c_out), jnp.float32),
        "beta": jnp.zeros((1, c_out), jnp.float32),
    }


# ---------------------------------------------------------------------------
# Pure-JAX reference (original unfused math, exact division)
# ---------------------------------------------------------------------------
def _reference_block(x, adj, M, w0, w1, a_src, a_dst, bias, gamma, beta):
    B, N, Cin = x.shape
    Cout = w0.shape[1]
    x2 = x.reshape(B * N, Cin)
    h0 = jnp.dot(x2, w0, preferred_element_type=jnp.float32).reshape(B, N, Cout)
    h1 = jnp.dot(x2, w1, preferred_element_type=jnp.float32).reshape(B, N, Cout)
    h = h0 + h1
    s_src = jnp.sum(h * a_src[None], axis=-1)
    s_dst = jnp.sum(h * a_dst[None], axis=-1)
    e = s_src[:, :, None] + s_dst[:, None, :]
    e = jnp.where(e > 0, e, ALPHA * e)
    att = jnp.where(adj[None, :, :] > 0, e, jnp.full_like(e, NEG_INF))
    att = att - jnp.max(att, axis=-1, keepdims=True)
    att = jnp.exp(att)
    att = att / jnp.sum(att, axis=-1, keepdims=True)
    hp = jnp.einsum('bij,bjc->bic', att * M[None], h0,
                    preferred_element_type=jnp.float32)
    hp = hp + jnp.einsum('bij,bjc->bic', att * (1.0 - M[None]), h1,
                         preferred_element_type=jnp.float32)
    hp = hp + bias[None]
    hp2 = hp.reshape(B * N, Cout)
    mean = jnp.mean(hp2, axis=0, keepdims=True)
    var = jnp.mean((hp2 - mean) ** 2, axis=0, keepdims=True)
    y = (hp - mean[None]) / jnp.sqrt(var[None] + BN_EPS)
    y = y * gamma[None] + beta[None]
    return jnp.maximum(y, 0.0)


def _reference(x, adj, params):
    N = adj.shape[0]
    M = jnp.eye(N, dtype=jnp.float32)
    y1 = _reference_block(x, adj, M,
                          params["w10"], params["w11"], params["as1"], params["ad1"],
                          params["b1"], params["g1"], params["be1"])
    y2 = _reference_block(y1, adj, M,
                          params["w20"], params["w21"], params["as2"], params["ad2"],
                          params["b2"], params["g2"], params["be2"])
    return y2 + x


if __name__ == "__main__":
    # ResGATBlock-consistent small shapes.
    B, N = 2, 8                  # batch, number of graph nodes
    C_IN = C_OUT = 16            # in_channels == out_channels -> identity residual
    HID = 32                     # hid_channels

    key = jax.random.PRNGKey(0)
    kx, k1, k2 = jax.random.split(key, 3)

    # Deterministic adjacency: ring with self-loops (every row has >= 1 neighbor).
    idx = jnp.arange(N)
    dist = jnp.abs(idx[:, None] - idx[None, :])
    adj = ((dist <= 1) | (dist == N - 1)).astype(jnp.float32)         # (N, N)

    x = jax.random.normal(kx, (B, N, C_IN), jnp.float32)

    p1 = _init_gat_params(k1, C_IN, HID)      # gat_block1: in -> hid
    p2 = _init_gat_params(k2, HID, C_OUT)     # gat_block2: hid -> out
    params = {
        "w10": p1["w0"], "w11": p1["w1"], "as1": p1["a_src"], "ad1": p1["a_dst"],
        "b1": p1["bias"], "g1": p1["gamma"], "be1": p1["beta"],
        "w20": p2["w0"], "w21": p2["w1"], "as2": p2["a_src"], "ad2": p2["a_dst"],
        "b2": p2["bias"], "g2": p2["gamma"], "be2": p2["beta"],
    }

    out = jax.block_until_ready(resgat_forward(x, adj, params))
    ref = jax.block_until_ready(_reference(x, adj, params))

    assert out.shape == (B, N, C_OUT)
    assert jnp.all(jnp.isfinite(out))
    # All-f32 math with an exact softmax reciprocal: only fp-associativity
    # differences vs. the unfused reference remain (was 1e-2 with approx recip).
    assert jnp.allclose(out, ref, atol=5e-4, rtol=5e-4)

    print("KERNEL_OK")
</pallas_src>

<mosaic_0001>
module attributes {stable_mosaic.version = 11 : i64} {
  func.func @kernel(%arg0: i32, %arg1: memref<2x8x128xf32, #tpu.memory_space<vmem>>, %arg2: memref<8x8xf32, #tpu.memory_space<vmem>>, %arg3: memref<128x256xf32, #tpu.memory_space<vmem>>, %arg4: memref<128x256xf32, #tpu.memory_space<vmem>>, %arg5: memref<8x128xf32, #tpu.memory_space<vmem>>, %arg6: memref<2x8x128xf32, #tpu.memory_space<vmem>>) attributes {dimension_semantics = [#tpu.dimension_semantics<arbitrary>], iteration_bounds = array<i64: 1>, scalar_prefetch = 0 : i64, scratch_operands = 0 : i64, tpu.core_type = #tpu.core_type<tc>, window_params = [{pipeline_mode = #tpu.pipeline_mode<synchronous>, transform_indices = @transform_0, window_bounds = array<i64: 2, 8, 128>}, {pipeline_mode = #tpu.pipeline_mode<synchronous>, transform_indices = @transform_1, window_bounds = array<i64: 8, 8>}, {pipeline_mode = #tpu.pipeline_mode<synchronous>, transform_indices = @transform_2, window_bounds = array<i64: 128, 256>}, {pipeline_mode = #tpu.pipeline_mode<synchronous>, transform_indices = @transform_3, window_bounds = array<i64: 128, 256>}, {pipeline_mode = #tpu.pipeline_mode<synchronous>, transform_indices = @transform_4, window_bounds = array<i64: 8, 128>}, {pipeline_mode = #tpu.pipeline_mode<synchronous>, transform_indices = @transform_5, window_bounds = array<i64: 2, 8, 128>}]} {
    %c0 = arith.constant 0 : index
    %c0_0 = arith.constant 0 : index
    %c0_1 = arith.constant 0 : index
    %0 = vector.load %arg1[%c0, %c0_0, %c0_1] : memref<2x8x128xf32, #tpu.memory_space<vmem>>, vector<2x8x128xf32>
    %c0_2 = arith.constant 0 : index
    %c0_3 = arith.constant 0 : index
    %1 = vector.load %arg2[%c0_2, %c0_3] : memref<8x8xf32, #tpu.memory_space<vmem>>, vector<8x8xf32>
    %c6 = arith.constant 6 : index
    %c0_4 = arith.constant 0 : index
    %2 = vector.load %arg5[%c6, %c0_4] : memref<8x128xf32, #tpu.memory_space<vmem>>, vector<1x8xf32>
    %c0_5 = arith.constant 0 : index
    %c0_6 = arith.constant 0 : index
    %3 = vector.load %arg3[%c0_5, %c0_6] : memref<128x256xf32, #tpu.memory_space<vmem>>, vector<128x256xf32>
    %c0_7 = arith.constant 0 : index
    %c0_8 = arith.constant 0 : index
    %4 = vector.load %arg5[%c0_7, %c0_8] : memref<8x128xf32, #tpu.memory_space<vmem>>, vector<1x128xf32>
    %c1 = arith.constant 1 : index
    %c0_9 = arith.constant 0 : index
    %5 = vector.load %arg5[%c1, %c0_9] : memref<8x128xf32, #tpu.memory_space<vmem>>, vector<1x128xf32>
    %c2 = arith.constant 2 : index
    %c0_10 = arith.constant 0 : index
    %6 = vector.load %arg5[%c2, %c0_10] : memref<8x128xf32, #tpu.memory_space<vmem>>, vector<1x128xf32>
    %7 = vector.shape_cast %0 : vector<2x8x128xf32> to vector<16x128xf32>
    %cst = arith.constant dense<0.000000e+00> : vector<16x256xf32>
    %8 = tpu.matmul %7, %3, %cst {dimension_numbers = #tpu.dot_dimension_numbers<[1], [0], [0], [1], [0, 0, 1, 1], [], []>} : vector<16x128xf32>, vector<128x256xf32>, vector<16x256xf32> -> vector<16x256xf32>
    %9 = vector.shape_cast %8 : vector<16x256xf32> to vector<2x8x256xf32>
    %10 = vector.extract_strided_slice %9 {offsets = [0, 0, 0], sizes = [2, 8, 128], strides = [1, 1, 1]} : vector<2x8x256xf32> to vector<2x8x128xf32>
    %11 = vector.extract_strided_slice %9 {offsets = [0, 0, 128], sizes = [2, 8, 128], strides = [1, 1, 1]} : vector<2x8x256xf32> to vector<2x8x128xf32>
    %12 = vector.extract_strided_slice %9 {offsets = [0, 0, 254], sizes = [2, 8, 1], strides = [1, 1, 1]} : vector<2x8x256xf32> to vector<2x8x1xf32>
    %cst_11 = arith.constant dense<0.000000e+00> : vector<2x8xf32>
    %13 = vector.multi_reduction <add>, %12, %cst_11 [2] : vector<2x8x1xf32> to vector<2x8xf32>
    %14 = vector.extract_strided_slice %9 {offsets = [0, 0, 255], sizes = [2, 8, 1], strides = [1, 1, 1]} : vector<2x8x256xf32> to vector<2x8x1xf32>
    %cst_12 = arith.constant dense<0.000000e+00> : vector<2x8xf32>
    %15 = vector.multi_reduction <add>, %14, %cst_12 [2] : vector<2x8x1xf32> to vector<2x8xf32>
    %16 = vector.shape_cast %13 : vector<2x8xf32> to vector<2x8x1xf32>
    %17 = vector.shape_cast %15 : vector<2x8xf32> to vector<2x1x8xf32>
    %18 = vector.broadcast %16 : vector<2x8x1xf32> to vector<2x8x8xf32>
    %19 = vector.broadcast %17 : vector<2x1x8xf32> to vector<2x8x8xf32>
    %20 = arith.addf %18, %19 : vector<2x8x8xf32>
    %cst_13 = arith.constant 0.000000e+00 : f32
    %21 = vector.broadcast %cst_13 : f32 to vector<2x8x8xf32>
    %22 = arith.cmpf ogt, %20, %21 : vector<2x8x8xf32>
    %cst_14 = arith.constant 2.000000e-01 : f32
    %23 = vector.broadcast %cst_14 : f32 to vector<2x8x8xf32>
    %24 = arith.mulf %23, %20 : vector<2x8x8xf32>
    %25 = arith.select %22, %20, %24 : vector<2x8x8xi1>, vector<2x8x8xf32>
    %26 = vector.shape_cast %1 : vector<8x8xf32> to vector<1x8x8xf32>
    %27 = vector.broadcast %26 : vector<1x8x8xf32> to vector<2x8x8xf32>
    %28 = arith.addf %25, %27 : vector<2x8x8xf32>
    %cst_15 = arith.constant dense<0xFF800000> : vector<2x8xf32>
    %29 = vector.multi_reduction <maximumf>, %28, %cst_15 [2] : vector<2x8x8xf32> to vector<2x8xf32>
    %30 = vector.shape_cast %29 : vector<2x8xf32> to vector<2x8x1xf32>
    %31 = vector.broadcast %30 : vector<2x8x1xf32> to vector<2x8x8xf32>
    %32 = arith.subf %28, %31 : vector<2x8x8xf32>
    %33 = math.exp %32 : vector<2x8x8xf32>
    %cst_16 = arith.constant dense<0.000000e+00> : vector<2x8xf32>
    %34 = vector.multi_reduction <add>, %33, %cst_16 [2] : vector<2x8x8xf32> to vector<2x8xf32>
    %cst_17 = arith.constant 1.000000e+00 : f32
    %35 = vector.broadcast %cst_17 : f32 to vector<2x8xf32>
    %36 = arith.divf %35, %34 : vector<2x8xf32>
    %37 = arith.addf %13, %15 : vector<2x8xf32>
    %cst_18 = arith.constant 0.000000e+00 : f32
    %38 = vector.broadcast %cst_18 : f32 to vector<2x8xf32>
    %39 = arith.cmpf ogt, %37, %38 : vector<2x8xf32>
    %cst_19 = arith.constant 2.000000e-01 : f32
    %40 = vector.broadcast %cst_19 : f32 to vector<2x8xf32>
    %41 = arith.mulf %40, %37 : vector<2x8xf32>
    %42 = arith.select %39, %37, %41 : vector<2x8xi1>, vector<2x8xf32>
    %43 = vector.broadcast %2 : vector<1x8xf32> to vector<2x8xf32>
    %44 = arith.addf %42, %43 : vector<2x8xf32>
    %45 = arith.subf %44, %29 : vector<2x8xf32>
    %46 = math.exp %45 : vector<2x8xf32>
    "tpu.trace_start"() <{level = 10 : i32, message = "bij,bjc->bic"}> : () -> ()
    %cst_20 = arith.constant dense<0.000000e+00> : vector<2x8x128xf32>
    %47 = tpu.matmul %33, %11, %cst_20 {dimension_numbers = #tpu.dot_dimension_numbers<[2], [1], [1], [2], [0, 0, 0, 1, 1, 2], [0], [0]>} : vector<2x8x8xf32>, vector<2x8x128xf32>, vector<2x8x128xf32> -> vector<2x8x128xf32>
    "tpu.trace_stop"() : () -> ()
    %48 = vector.shape_cast %36 : vector<2x8xf32> to vector<2x8x1xf32>
    %49 = vector.shape_cast %46 : vector<2x8xf32> to vector<2x8x1xf32>
    %50 = arith.subf %10, %11 : vector<2x8x128xf32>
    %51 = vector.broadcast %49 : vector<2x8x1xf32> to vector<2x8x128xf32>
    %52 = arith.mulf %51, %50 : vector<2x8x128xf32>
    %53 = arith.addf %47, %52 : vector<2x8x128xf32>
    %54 = vector.broadcast %48 : vector<2x8x1xf32> to vector<2x8x128xf32>
    %55 = arith.mulf %54, %53 : vector<2x8x128xf32>
    %56 = vector.shape_cast %4 : vector<1x128xf32> to vector<1x1x128xf32>
    %57 = vector.broadcast %56 : vector<1x1x128xf32> to vector<2x8x128xf32>
    %58 = arith.addf %55, %57 : vector<2x8x128xf32>
    %59 = vector.shape_cast %58 : vector<2x8x128xf32> to vector<16x128xf32>
    %cst_21 = arith.constant dense<0.000000e+00> : vector<128xf32>
    %60 = vector.multi_reduction <add>, %59, %cst_21 [0] : vector<16x128xf32> to vector<128xf32>
    %61 = vector.shape_cast %60 : vector<128xf32> to vector<1x128xf32>
    %cst_22 = arith.constant 1.600000e+01 : f32
    %62 = vector.broadcast %cst_22 : f32 to vector<1x128xf32>
    %63 = arith.divf %61, %62 : vector<1x128xf32>
    %64 = vector.broadcast %63 : vector<1x128xf32> to vector<16x128xf32>
    %65 = arith.subf %59, %64 : vector<16x128xf32>
    %66 = arith.mulf %65, %65 : vector<16x128xf32>
    %cst_23 = arith.constant dense<0.000000e+00> : vector<128xf32>
    %67 = vector.multi_reduction <add>, %66, %cst_23 [0] : vector<16x128xf32> to vector<128xf32>
    %68 = vector.shape_cast %67 : vector<128xf32> to vector<1x128xf32>
    %cst_24 = arith.constant 1.600000e+01 : f32
    %69 = vector.broadcast %cst_24 : f32 to vector<1x128xf32>
    %70 = arith.divf %68, %69 : vector<1x128xf32>
    %cst_25 = arith.constant 9.99999974E-6 : f32
    %71 = vector.broadcast %cst_25 : f32 to vector<1x128xf32>
    %72 = arith.addf %70, %71 : vector<1x128xf32>
    %73 = math.rsqrt %72 : vector<1x128xf32>
    %74 = arith.mulf %5, %73 : vector<1x128xf32>
    %75 = vector.shape_cast %63 : vector<1x128xf32> to vector<1x1x128xf32>
    %76 = vector.broadcast %75 : vector<1x1x128xf32> to vector<2x8x128xf32>
    %77 = arith.subf %58, %76 : vector<2x8x128xf32>
    %78 = vector.shape_cast %74 : vector<1x128xf32> to vector<1x1x128xf32>
    %79 = vector.broadcast %78 : vector<1x1x128xf32> to vector<2x8x128xf32>
    %80 = arith.mulf %77, %79 : vector<2x8x128xf32>
    %81 = vector.shape_cast %6 : vector<1x128xf32> to vector<1x1x128xf32>
    %82 = vector.broadcast %81 : vector<1x1x128xf32> to vector<2x8x128xf32>
    %83 = arith.addf %80, %82 : vector<2x8x128xf32>
    %cst_26 = arith.constant 0.000000e+00 : f32
    %84 = vector.broadcast %cst_26 : f32 to vector<2x8x128xf32>
    %85 = arith.maximumf %83, %84 : vector<2x8x128xf32>
    %c0_27 = arith.constant 0 : index
    %c0_28 = arith.constant 0 : index
    %86 = vector.load %arg4[%c0_27, %c0_28] : memref<128x256xf32, #tpu.memory_space<vmem>>, vector<128x256xf32>
    %c3 = arith.constant 3 : index
    %c0_29 = arith.constant 0 : index
    %87 = vector.load %arg5[%c3, %c0_29] : memref<8x128xf32, #tpu.memory_space<vmem>>, vector<1x128xf32>
    %c4 = arith.constant 4 : index
    %c0_30 = arith.constant 0 : index
    %88 = vector.load %arg5[%c4, %c0_30] : memref<8x128xf32, #tpu.memory_space<vmem>>, vector<1x128xf32>
    %c5 = arith.constant 5 : index
    %c0_31 = arith.constant 0 : index
    %89 = vector.load %arg5[%c5, %c0_31] : memref<8x128xf32, #tpu.memory_space<vmem>>, vector<1x128xf32>
    %90 = vector.shape_cast %85 : vector<2x8x128xf32> to vector<16x128xf32>
    %cst_32 = arith.constant dense<0.000000e+00> : vector<16x256xf32>
    %91 = tpu.matmul %90, %86, %cst_32 {dimension_numbers = #tpu.dot_dimension_numbers<[1], [0], [0], [1], [0, 0, 1, 1], [], []>} : vector<16x128xf32>, vector<128x256xf32>, vector<16x256xf32> -> vector<16x256xf32>
    %92 = vector.shape_cast %91 : vector<16x256xf32> to vector<2x8x256xf32>
    %93 = vector.extract_strided_slice %92 {offsets = [0, 0, 0], sizes = [2, 8, 128], strides = [1, 1, 1]} : vector<2x8x256xf32> to vector<2x8x128xf32>
    %94 = vector.extract_strided_slice %92 {offsets = [0, 0, 128], sizes = [2, 8, 128], strides = [1, 1, 1]} : vector<2x8x256xf32> to vector<2x8x128xf32>
    %95 = vector.extract_strided_slice %92 {offsets = [0, 0, 254], sizes = [2, 8, 1], strides = [1, 1, 1]} : vector<2x8x256xf32> to vector<2x8x1xf32>
    %cst_33 = arith.constant dense<0.000000e+00> : vector<2x8xf32>
    %96 = vector.multi_reduction <add>, %95, %cst_33 [2] : vector<2x8x1xf32> to vector<2x8xf32>
    %97 = vector.extract_strided_slice %92 {offsets = [0, 0, 255], sizes = [2, 8, 1], strides = [1, 1, 1]} : vector<2x8x256xf32> to vector<2x8x1xf32>
    %cst_34 = arith.constant dense<0.000000e+00> : vector<2x8xf32>
    %98 = vector.multi_reduction <add>, %97, %cst_34 [2] : vector<2x8x1xf32> to vector<2x8xf32>
    %99 = vector.shape_cast %96 : vector<2x8xf32> to vector<2x8x1xf32>
    %100 = vector.shape_cast %98 : vector<2x8xf32> to vector<2x1x8xf32>
    %101 = vector.broadcast %99 : vector<2x8x1xf32> to vector<2x8x8xf32>
    %102 = vector.broadcast %100 : vector<2x1x8xf32> to vector<2x8x8xf32>
    %103 = arith.addf %101, %102 : vector<2x8x8xf32>
    %cst_35 = arith.constant 0.000000e+00 : f32
    %104 = vector.broadcast %cst_35 : f32 to vector<2x8x8xf32>
    %105 = arith.cmpf ogt, %103, %104 : vector<2x8x8xf32>
    %cst_36 = arith.constant 2.000000e-01 : f32
    %106 = vector.broadcast %cst_36 : f32 to vector<2x8x8xf32>
    %107 = arith.mulf %106, %103 : vector<2x8x8xf32>
    %108 = arith.select %105, %103, %107 : vector<2x8x8xi1>, vector<2x8x8xf32>
    %109 = vector.shape_cast %1 : vector<8x8xf32> to vector<1x8x8xf32>
    %110 = vector.broadcast %109 : vector<1x8x8xf32> to vector<2x8x8xf32>
    %111 = arith.addf %108, %110 : vector<2x8x8xf32>
    %cst_37 = arith.constant dense<0xFF800000> : vector<2x8xf32>
    %112 = vector.multi_reduction <maximumf>, %111, %cst_37 [2] : vector<2x8x8xf32> to vector<2x8xf32>
    %113 = vector.shape_cast %112 : vector<2x8xf32> to vector<2x8x1xf32>
    %114 = vector.broadcast %113 : vector<2x8x1xf32> to vector<2x8x8xf32>
    %115 = arith.subf %111, %114 : vector<2x8x8xf32>
    %116 = math.exp %115 : vector<2x8x8xf32>
    %cst_38 = arith.constant dense<0.000000e+00> : vector<2x8xf32>
    %117 = vector.multi_reduction <add>, %116, %cst_38 [2] : vector<2x8x8xf32> to vector<2x8xf32>
    %cst_39 = arith.constant 1.000000e+00 : f32
    %118 = vector.broadcast %cst_39 : f32 to vector<2x8xf32>
    %119 = arith.divf %118, %117 : vector<2x8xf32>
    %120 = arith.addf %96, %98 : vector<2x8xf32>
    %cst_40 = arith.constant 0.000000e+00 : f32
    %121 = vector.broadcast %cst_40 : f32 to vector<2x8xf32>
    %122 = arith.cmpf ogt, %120, %121 : vector<2x8xf32>
    %cst_41 = arith.constant 2.000000e-01 : f32
    %123 = vector.broadcast %cst_41 : f32 to vector<2x8xf32>
    %124 = arith.mulf %123, %120 : vector<2x8xf32>
    %125 = arith.select %122, %120, %124 : vector<2x8xi1>, vector<2x8xf32>
    %126 = vector.broadcast %2 : vector<1x8xf32> to vector<2x8xf32>
    %127 = arith.addf %125, %126 : vector<2x8xf32>
    %128 = arith.subf %127, %112 : vector<2x8xf32>
    %129 = math.exp %128 : vector<2x8xf32>
    "tpu.trace_start"() <{level = 10 : i32, message = "bij,bjc->bic"}> : () -> ()
    %cst_42 = arith.constant dense<0.000000e+00> : vector<2x8x128xf32>
    %130 = tpu.matmul %116, %94, %cst_42 {dimension_numbers = #tpu.dot_dimension_numbers<[2], [1], [1], [2], [0, 0, 0, 1, 1, 2], [0], [0]>} : vector<2x8x8xf32>, vector<2x8x128xf32>, vector<2x8x128xf32> -> vector<2x8x128xf32>
    "tpu.trace_stop"() : () -> ()
    %131 = vector.shape_cast %119 : vector<2x8xf32> to vector<2x8x1xf32>
    %132 = vector.shape_cast %129 : vector<2x8xf32> to vector<2x8x1xf32>
    %133 = arith.subf %93, %94 : vector<2x8x128xf32>
    %134 = vector.broadcast %132 : vector<2x8x1xf32> to vector<2x8x128xf32>
    %135 = arith.mulf %134, %133 : vector<2x8x128xf32>
    %136 = arith.addf %130, %135 : vector<2x8x128xf32>
    %137 = vector.broadcast %131 : vector<2x8x1xf32> to vector<2x8x128xf32>
    %138 = arith.mulf %137, %136 : vector<2x8x128xf32>
    %139 = vector.shape_cast %87 : vector<1x128xf32> to vector<1x1x128xf32>
    %140 = vector.broadcast %139 : vector<1x1x128xf32> to vector<2x8x128xf32>
    %141 = arith.addf %138, %140 : vector<2x8x128xf32>
    %142 = vector.shape_cast %141 : vector<2x8x128xf32> to vector<16x128xf32>
    %cst_43 = arith.constant dense<0.000000e+00> : vector<128xf32>
    %143 = vector.multi_reduction <add>, %142, %cst_43 [0] : vector<16x128xf32> to vector<128xf32>
    %144 = vector.shape_cast %143 : vector<128xf32> to vector<1x128xf32>
    %cst_44 = arith.constant 1.600000e+01 : f32
    %145 = vector.broadcast %cst_44 : f32 to vector<1x128xf32>
    %146 = arith.divf %144, %145 : vector<1x128xf32>
    %147 = vector.broadcast %146 : vector<1x128xf32> to vector<16x128xf32>
    %148 = arith.subf %142, %147 : vector<16x128xf32>
    %149 = arith.mulf %148, %148 : vector<16x128xf32>
    %cst_45 = arith.constant dense<0.000000e+00> : vector<128xf32>
    %150 = vector.multi_reduction <add>, %149, %cst_45 [0] : vector<16x128xf32> to vector<128xf32>
    %151 = vector.shape_cast %150 : vector<128xf32> to vector<1x128xf32>
    %cst_46 = arith.constant 1.600000e+01 : f32
    %152 = vector.broadcast %cst_46 : f32 to vector<1x128xf32>
    %153 = arith.divf %151, %152 : vector<1x128xf32>
    %cst_47 = arith.constant 9.99999974E-6 : f32
    %154 = vector.broadcast %cst_47 : f32 to vector<1x128xf32>
    %155 = arith.addf %153, %154 : vector<1x128xf32>
    %156 = math.rsqrt %155 : vector<1x128xf32>
    %157 = arith.mulf %88, %156 : vector<1x128xf32>
    %158 = vector.shape_cast %146 : vector<1x128xf32> to vector<1x1x128xf32>
    %159 = vector.broadcast %158 : vector<1x1x128xf32> to vector<2x8x128xf32>
    %160 = arith.subf %141, %159 : vector<2x8x128xf32>
    %161 = vector.shape_cast %157 : vector<1x128xf32> to vector<1x1x128xf32>
    %162 = vector.broadcast %161 : vector<1x1x128xf32> to vector<2x8x128xf32>
    %163 = arith.mulf %160, %162 : vector<2x8x128xf32>
    %164 = vector.shape_cast %89 : vector<1x128xf32> to vector<1x1x128xf32>
    %165 = vector.broadcast %164 : vector<1x1x128xf32> to vector<2x8x128xf32>
    %166 = arith.addf %163, %165 : vector<2x8x128xf32>
    %cst_48 = arith.constant 0.000000e+00 : f32
    %167 = vector.broadcast %cst_48 : f32 to vector<2x8x128xf32>
    %168 = arith.maximumf %166, %167 : vector<2x8x128xf32>
    %169 = arith.addf %168, %0 : vector<2x8x128xf32>
    %c0_49 = arith.constant 0 : index
    %c0_50 = arith.constant 0 : index
    %c0_51 = arith.constant 0 : index
    %170 = vector.load %arg6[%c0_49, %c0_50, %c0_51] : memref<2x8x128xf32, #tpu.memory_space<vmem>>, vector<2x8x128xf32>
    tpu.vector_store %arg6[%c0_49, %c0_50, %c0_51], %169 {strides = array<i32>} : memref<2x8x128xf32, #tpu.memory_space<vmem>>, vector<2x8x128xf32>,
    return
  }
  func.func @transform_0(%arg0: i32) -> (i32, i32, i32) {
    %c0_i32 = arith.constant 0 : i32
    %c0_i32_0 = arith.constant 0 : i32
    %c0_i32_1 = arith.constant 0 : i32
    %c0_i32_2 = arith.constant 0 : i32
    return %c0_i32, %c0_i32_0, %c0_i32_1 : i32, i32, i32
  }
  func.func @transform_1(%arg0: i32) -> (i32, i32) {
    %c0_i32 = arith.constant 0 : i32
    %c0_i32_0 = arith.constant 0 : i32
    %c0_i32_1 = arith.constant 0 : i32
    return %c0_i32, %c0_i32_0 : i32, i32
  }
  func.func @transform_2(%arg0: i32) -> (i32, i32) {
    %c0_i32 = arith.constant 0 : i32
    %c0_i32_0 = arith.constant 0 : i32
    %c0_i32_1 = arith.constant 0 : i32
    return %c0_i32, %c0_i32_0 : i32, i32
  }
  func.func @transform_3(%arg0: i32) -> (i32, i32) {
    %c0_i32 = arith.constant 0 : i32
    %c0_i32_0 = arith.constant 0 : i32
    %c0_i32_1 = arith.constant 0 : i32
    return %c0_i32, %c0_i32_0 : i32, i32
  }
  func.func @transform_4(%arg0: i32) -> (i32, i32) {
    %c0_i32 = arith.constant 0 : i32
    %c0_i32_0 = arith.constant 0 : i32
    %c0_i32_1 = arith.constant 0 : i32
    return %c0_i32, %c0_i32_0 : i32, i32
  }
  func.func @transform_5(%arg0: i32) -> (i32, i32, i32) {
    %c0_i32 = arith.constant 0 : i32
    %c0_i32_0 = arith.constant 0 : i32
    %c0_i32_1 = arith.constant 0 : i32
    %c0_i32_2 = arith.constant 0 : i32
    return %c0_i32, %c0_i32_0, %c0_i32_1 : i32, i32, i32
  }
}

</mosaic_0001>

<llo_original>
// kernel: tpu_custom_call.1
$region0: #{tpu_custom_call.1}
  #allocation0 [shape = 'u32[]', space=smem, size = 0x4, offset = 0x4, fixed_abs, tag = 'smem constant byte address 0x4 - core index']
  #allocation1 [shape = 'u32[144,128]{1,0:T(1,128)}', space=vmem, size = 0x12000, scoped, tag = 'internal scratch']
  %s0 = inlined_call_operand.hbm [shape: f32[2,8,128], index: 0, kind: input, shape index: {}]
  %s1 = inlined_call_operand.hbm [shape: f32[8,8], index: 1, kind: input, shape index: {}]
  %s2 = inlined_call_operand.hbm [shape: f32[128,256], index: 2, kind: input, shape index: {}]
  %s3 = inlined_call_operand.hbm [shape: f32[128,256], index: 3, kind: input, shape index: {}]
  %s4 = inlined_call_operand.vmem [shape: f32[8,128], index: 4, kind: input, shape index: {}]
  %s5 = inlined_call_operand.hbm [shape: f32[2,8,128], index: 5, kind: output, shape index: {}]
  %s6 = sld [smem:[#allocation0]]
  $region46: #{tpu_custom_call.1} parent=0
    _
  %s8 = ssub.s32 1, %s6
  %s9 = scalar_select 0, %s8, %s6
  $region1: #{tpu_custom_call.1} parent=0
    #allocation2 [shape = 'u8[8192]{0}', space=vmem, size = 0x2000, scoped, tag = 'input window, operand 0, single buffered']
    #allocation3 [shape = 's32[1]{0}', space=sflag, size = 0x4, scoped, tag = 'scoped memory for tpu_custom_call.1']
    #allocation4 [shape = 's32[1]{0}', space=sflag, size = 0x4, scoped, tag = 'scoped memory for tpu_custom_call.1']
    #allocation5 [shape = 'u8[4096]{0}', space=vmem, size = 0x1000, scoped, tag = 'input window, operand 1, single buffered']
    #allocation6 [shape = 's32[1]{0}', space=sflag, size = 0x4, scoped, tag = 'scoped memory for tpu_custom_call.1']
    #allocation7 [shape = 'u8[131072]{0}', space=vmem, size = 0x20000, scoped, tag = 'input window, operand 2, single buffered']
    #allocation8 [shape = 'u8[131072]{0}', space=vmem, size = 0x20000, scoped, tag = 'input window, operand 3, single buffered']
    #allocation9 [shape = 's32[1]{0}', space=sflag, size = 0x4, scoped, tag = 'scoped memory for tpu_custom_call.1']
    #allocation10 [shape = 'u8[8192]{0}', space=vmem, size = 0x2000, scoped, tag = 'output window, operand 0, single buffered']
    %10 = vsyncpa [#allocation3], 0
    %11 = vsyncpa [#allocation6], 0
    %12 = vsyncpa [#allocation9], 0
    %13 = vsyncpa [#allocation4], 0
    // Predicated region
    $region2: #{tpu_custom_call.1} parent=1 // pred_check
      _
    $region3: #{tpu_custom_call.1} parent=1 // pred_check_branch
      %15 = sbr.rel (0) target = $region5
    $region4: #{tpu_custom_call.1} parent=1 // pred_region
      %s17 = ssub.s32 256, 256
      %18 = vsyncadd [#allocation3], %s17
      %s19 = sshll.u32 [#allocation2], 4
      %s20 = int_to_ptr.vmem [resolvable:$true] %s19
      %25 = dma.hbm_to_vmem [thread:$0]  %s0, 256, %s20, [#allocation3], 128, 128, 8
    $region5: #{tpu_custom_call.1} parent=1 // pred_fallthru
      _
    // Predicated region
    $region6: #{tpu_custom_call.1} parent=1 // pred_check
      _
    $region7: #{tpu_custom_call.1} parent=1 // pred_check_branch
      %27 = sbr.rel (0) target = $region9
    $region8: #{tpu_custom_call.1} parent=1 // pred_region
      %s29 = ssub.s32 128, 128
      %30 = vsyncadd [#allocation6], %s29
      %s32 = sshll.u32 [#allocation5], 4
      %s33 = int_to_ptr.vmem [resolvable:$true] %s32
      %35 = dma.hbm_to_vmem [thread:$0]  %s1, 128, %s33, [#allocation6]
    $region9: #{tpu_custom_call.1} parent=1 // pred_fallthru
      _
    // Predicated region
    $region10: #{tpu_custom_call.1} parent=1 // pred_check
      _
    $region11: #{tpu_custom_call.1} parent=1 // pred_check_branch
      %37 = sbr.rel (0) target = $region13
    $region12: #{tpu_custom_call.1} parent=1 // pred_region
      %s39 = ssub.s32 4096, 4096
      %40 = vsyncadd [#allocation6], %s39
      %s41 = sshll.u32 [#allocation7], 4
      %s42 = int_to_ptr.vmem [resolvable:$true] %s41
      %47 = dma.hbm_to_vmem [thread:$0]  %s2, 4096, %s42, [#allocation6], 256, 256, 16
    $region13: #{tpu_custom_call.1} parent=1 // pred_fallthru
      _
    // Predicated region
    $region14: #{tpu_custom_call.1} parent=1 // pred_check
      _
    $region15: #{tpu_custom_call.1} parent=1 // pred_check_branch
      %49 = sbr.rel (0) target = $region17
    $region16: #{tpu_custom_call.1} parent=1 // pred_region
      %s51 = ssub.s32 4096, 4096
      %52 = vsyncadd [#allocation9], %s51
      %s53 = sshll.u32 [#allocation8], 4
      %s54 = int_to_ptr.vmem [resolvable:$true] %s53
      %59 = dma.hbm_to_vmem [thread:$0]  %s3, 4096, %s54, [#allocation9], 256, 256, 16
    $region17: #{tpu_custom_call.1} parent=1 // pred_fallthru
      _
    // Predicated region
    $region18: #{tpu_custom_call.1} parent=1 // pred_check
      _
    $region19: #{tpu_custom_call.1} parent=1 // pred_check_branch
      %61 = sbr.rel (0) target = $region21
    $region20: #{tpu_custom_call.1} parent=1 // pred_region
      _
    $region21: #{tpu_custom_call.1} parent=1 // pred_fallthru
      _
    // Predicated region
    $region22: #{tpu_custom_call.1} parent=1 // pred_check
      _
    $region23: #{tpu_custom_call.1} parent=1 // pred_check_branch
      %63 = sbr.rel (0) target = $region25
    $region24: #{tpu_custom_call.1} parent=1 // pred_region
      %64 = dma.done [#allocation3], 256
    $region25: #{tpu_custom_call.1} parent=1 // pred_fallthru
      _
    // Predicated region
    $region26: #{tpu_custom_call.1} parent=1 // pred_check
      _
    $region27: #{tpu_custom_call.1} parent=1 // pred_check_branch
      %66 = sbr.rel (0) target = $region29
    $region28: #{tpu_custom_call.1} parent=1 // pred_region
      %67 = dma.done [#allocation6], 128
    $region29: #{tpu_custom_call.1} parent=1 // pred_fallthru
      _
    // Predicated region
    $region30: #{tpu_custom_call.1} parent=1 // pred_check
      _
    $region31: #{tpu_custom_call.1} parent=1 // pred_check_branch
      %69 = sbr.rel (0) target = $region33
    $region32: #{tpu_custom_call.1} parent=1 // pred_region
      %70 = dma.done [#allocation6], 4096
    $region33: #{tpu_custom_call.1} parent=1 // pred_fallthru
      _
    // Predicated region
    $region34: #{tpu_custom_call.1} parent=1 // pred_check
      _
    $region35: #{tpu_custom_call.1} parent=1 // pred_check_branch
      %72 = sbr.rel (0) target = $region37
    $region36: #{tpu_custom_call.1} parent=1 // pred_region
      %73 = dma.done [#allocation9], 4096
    $region37: #{tpu_custom_call.1} parent=1 // pred_fallthru
      _
    %v74 = vld [vmem:[#allocation2] sm:$0xff]
    %v75 = vld [vmem:[#allocation2 + $0x8] sm:$0xff]
    %v76 = vld [vmem:[#allocation5] sm:$0xff]
    %v77 = vld [vmem:[%s4 + $0x6] sm:$0x1]
    %v78 = vld [vmem:[#allocation7] sm:$0xff]
    %v79 = vld [vmem:[#allocation7 + $0x8] sm:$0xff]
    %v80 = vld [vmem:[#allocation7 + $0x10] sm:$0xff]
    %v81 = vld [vmem:[#allocation7 + $0x18] sm:$0xff]
    %v82 = vld [vmem:[#allocation7 + $0x20] sm:$0xff]
    %v83 = vld [vmem:[#allocation7 + $0x28] sm:$0xff]
    %v84 = vld [vmem:[#allocation7 + $0x30] sm:$0xff]
    %v85 = vld [vmem:[#allocation7 + $0x38] sm:$0xff]
    %v86 = vld [vmem:[#allocation7 + $0x40] sm:$0xff]
    %v87 = vld [vmem:[#allocation7 + $0x48] sm:$0xff]
    %v88 = vld [vmem:[#allocation7 + $0x50] sm:$0xff]
    %v89 = vld [vmem:[#allocation7 + $0x58] sm:$0xff]
    %v90 = vld [vmem:[#allocation7 + $0x60] sm:$0xff]
    %v91 = vld [vmem:[#allocation7 + $0x68] sm:$0xff]
    %v92 = vld [vmem:[#allocation7 + $0x70] sm:$0xff]
    %v93 = vld [vmem:[#allocation7 + $0x78] sm:$0xff]
    %v94 = vld [vmem:[#allocation7 + $0x80] sm:$0xff]
    %v95 = vld [vmem:[#allocation7 + $0x88] sm:$0xff]
    %v96 = vld [vmem:[#allocation7 + $0x90] sm:$0xff]
    %v97 = vld [vmem:[#allocation7 + $0x98] sm:$0xff]
    %v98 = vld [vmem:[#allocation7 + $0xa0] sm:$0xff]
    %v99 = vld [vmem:[#allocation7 + $0xa8] sm:$0xff]
    %v100 = vld [vmem:[#allocation7 + $0xb0] sm:$0xff]
    %v101 = vld [vmem:[#allocation7 + $0xb8] sm:$0xff]
    %v102 = vld [vmem:[#allocation7 + $0xc0] sm:$0xff]
    %v103 = vld [vmem:[#allocation7 + $0xc8] sm:$0xff]
    %v104 = vld [vmem:[#allocation7 + $0xd0] sm:$0xff]
    %v105 = vld [vmem:[#allocation7 + $0xd8] sm:$0xff]
    %v106 = vld [vmem:[#allocation7 + $0xe0] sm:$0xff]
    %v107 = vld [vmem:[#allocation7 + $0xe8] sm:$0xff]
    %v108 = vld [vmem:[#allocation7 + $0xf0] sm:$0xff]
    %v109 = vld [vmem:[#allocation7 + $0xf8] sm:$0xff]
    %v110 = vld [vmem:[%s4] sm:$0x1]
    %v111 = vld [vmem:[%s4 + $0x1] sm:$0x1]
    %v112 = vld [vmem:[%s4 + $0x2] sm:$0x1]
    %113 = vmatprep.subr.mxu0 %v79
    %114 = vmatpush1.msra.mxu0 %v78
    %115 = vmatprep.subr.mxu0 %v81
    %116 = vmatpush1.msra.mxu0 %v80
    %117 = vmatprep.subr.mxu0 %v83
    %118 = vmatpush1.msra.mxu0 %v82
    %119 = vmatprep.subr.mxu0 %v85
    %120 = vmatpush1.msra.mxu0 %v84
    %121 = vmatprep.subr.mxu0 %v87
    %122 = vmatpush1.msra.mxu0 %v86
    %123 = vmatprep.subr.mxu0 %v89
    %124 = vmatpush1.msra.mxu0 %v88
    %125 = vmatprep.subr.mxu0 %v91
    %126 = vmatpush1.msra.mxu0 %v90
    %127 = vmatprep.subr.mxu0 %v93
    %128 = vmatpush1.msra.mxu0 %v92
    %129 = vmatprep.subr.mxu0 %v95
    %130 = vmatpush1.msra.mxu0 %v94
    %131 = vmatprep.subr.mxu0 %v97
    %132 = vmatpush1.msra.mxu0 %v96
    %133 = vmatprep.subr.mxu0 %v99
    %134 = vmatpush1.msra.mxu0 %v98
    %135 = vmatprep.subr.mxu0 %v101
    %136 = vmatpush1.msra.mxu0 %v100
    %137 = vmatprep.subr.mxu0 %v103
    %138 = vmatpush1.msra.mxu0 %v102
    %139 = vmatprep.subr.mxu0 %v105
    %140 = vmatpush1.msra.mxu0 %v104
    %141 = vmatprep.subr.mxu0 %v107
    %142 = vmatpush1.msra.mxu0 %v106
    %143 = vmatprep.subr.mxu0 %v109
    %144 = vmatpush1.msra.mxu0 %v108
    %145 = vmatprep.subr.mxu0 0.0
    %146 = vmatpush1.msra.mxu0 0.0
    %147 = vmatprep.subr.mxu0 0.0
    %148 = vmatpush1.msra.mxu0 0.0
    %149 = vmatprep.subr.mxu0 0.0
    %150 = vmatpush1.msra.mxu0 0.0
    %151 = vmatprep.subr.mxu0 0.0
    %152 = vmatpush1.msra.mxu0 0.0
    %153 = vmatprep.subr.mxu0 0.0
    %154 = vmatpush1.msra.mxu0 0.0
    %155 = vmatprep.subr.mxu0 0.0
    %156 = vmatpush1.msra.mxu0 0.0
    %157 = vmatprep.subr.mxu0 0.0
    %158 = vmatpush1.msra.mxu0 0.0
    %159 = vmatprep.subr.mxu0 0.0
    %160 = vmatpush1.msra.mxu0 0.0
    %161 = vmatprep.subr.mxu0 0.0
    %162 = vmatpush1.msra.mxu0 0.0
    %163 = vmatprep.subr.mxu0 0.0
    %164 = vmatpush1.msra.mxu0 0.0
    %165 = vmatprep.subr.mxu0 0.0
    %166 = vmatpush1.msra.mxu0 0.0
    %167 = vmatprep.subr.mxu0 0.0
    %168 = vmatpush1.msra.mxu0 0.0
    %169 = vmatprep.subr.mxu0 0.0
    %170 = vmatpush1.msra.mxu0 0.0
    %171 = vmatprep.subr.mxu0 0.0
    %172 = vmatpush1.msra.mxu0 0.0
    %173 = vmatprep.subr.mxu0 0.0
    %174 = vmatpush1.msra.mxu0 0.0
    %175 = vmatprep.subr.mxu0 0.0
    %176 = vmatpush1.msra.mxu0 0.0
    %177 = vmatprep.mubr.f32.mxu0 0.0
    %178 = vmatmul.mubr.f32.gmra.mrb[0].mxu0 %v74
    %v179 = vpop.f32.mrb[0].mxu0
    %v180 = vadd.f32 0.0, %v179
    %v181 = vpop.f32.mrb[0].mxu0
    %v182 = vadd.f32 0.0, %v181
    %183 = vmatprep.mubr.f32.mxu0 0.0
    %184 = vmatmul.mubr.f32.gmra.mrb[0].mxu0 %v75
    %v185 = vpop.f32.mrb[0].mxu0
    %v186 = vadd.f32 0.0, %v185
    %v187 = vpop.f32.mrb[0].mxu0
    %v188 = vadd.f32 0.0, %v187
    %189 = vdwg.mxu0
    %v190 = vadd.f32 %v182, 0.0
    %v191 = vadd.f32 %v188, 0.0
    %193 = vset.pattern.permute.xlu0 126
    %194 = vperm.xlu0 %193, %v190
    %v195 = vpop.permute.xlu0 %194
    %198 = vset.pattern.permute.xlu0 126
    %199 = vperm.xlu0 %198, %v191
    %v200 = vpop.permute.xlu0 %199
    %202 = vset.pattern.permute.xlu0 127
    %203 = vperm.xlu0 %202, %v190
    %v204 = vpop.permute.xlu0 %203
    %205 = vset.pattern.permute.xlu0 127
    %206 = vperm.xlu0 %205, %v191
    %v207 = vpop.permute.xlu0 %206
    %v208 = vlaneseq
    %v209 = vand.u32 %v208, 127
    %v210 = vlaneseq
    %v211 = vshrl.u32 %v210, 7
    %v212 = vsub.s32 %v209, %v211
    %v213 = vrot.slane %v204, %v212
    %v214 = vlaneseq
    %v215 = vshrl.u32 %v214, 7
    %v216 = vsub.s32 %v209, %v215
    %v217 = vrot.slane %v207, %v216
    %vm218 = vcmask 1042434
    %v219 = vsel %vm218, %v213, %v213
    %vm220 = vcmask 1043459
    %v221 = vsel %vm220, %v213, %v219
    %vm222 = vcmask 1044484
    %v223 = vsel %vm222, %v213, %v221
    %vm224 = vcmask 1045509
    %v225 = vsel %vm224, %v213, %v223
    %vm226 = vcmask 1046534
    %v227 = vsel %vm226, %v213, %v225
    %vm228 = vcmask 1047559
    %v229 = vsel %vm228, %v213, %v227
    %v230 = vsel %vm218, %v217, %v217
    %v231 = vsel %vm220, %v217, %v230
    %v232 = vsel %vm222, %v217, %v231
    %v233 = vsel %vm224, %v217, %v232
    %v234 = vsel %vm226, %v217, %v233
    %v235 = vsel %vm228, %v217, %v234
    %v238 = vadd.f32 %v195, %v229
    %v239 = vadd.f32 %v200, %v235
    %vm240 = vcmp.gt.f32.partialorder %v238, 0.0
    %vm241 = vcmp.gt.f32.partialorder %v239, 0.0
    %v242 = vmul.f32 %v238, 0.2
    %v243 = vmul.f32 %v239, 0.2
    %v244 = vsel %vm240, %v238, %v242
    %v245 = vsel %vm241, %v239, %v243
    %v246 = vadd.f32 %v244, %v76
    %v247 = vadd.f32 %v245, %v76
    %vm248 = vcmask 64512
    %v249 = vsel %vm248, %v246, -inf
    %250 = vmax.xlane.f32.xlu0 %v249
    %v251 = vpop.xlane.xlu0 %250
    %v252 = vsel %vm248, %v247, -inf
    %253 = vmax.xlane.f32.xlu0 %v252
    %v254 = vpop.xlane.xlu0 %253
    %v255 = vsub.f32 %v246, %v251
    %v256 = vsub.f32 %v247, %v254
    %v257 = vmul.f32 %v255, 1.442695
    %v258 = vpow.pop %v257
    %v259 = vmul.f32 %v256, 1.442695
    %v260 = vpow.pop %v259
    %v261 = vsel %vm248, %v258, 0.0
    %262 = vadd.xlane.f32.xlu0 %v261
    %v263 = vpop.xlane.xlu0 %262
    %v264 = vsel %vm248, %v260, 0.0
    %265 = vadd.xlane.f32.xlu0 %v264
    %v266 = vpop.xlane.xlu0 %265
    %v267 = vrcp.pop %v263
    %v268 = vmul.f32 1.0, %v267
    %v269 = vrcp.pop %v266
    %v270 = vmul.f32 1.0, %v269
    %271 = vrot.lane.b32.xlu0 %v190, 127
    %v272 = vpop.permute.xlu0 %271
    %273 = vrot.lane.b32.xlu0 %v191, 127
    %v274 = vpop.permute.xlu0 %273
    %v277 = vadd.f32 %v190, %v272
    %v278 = vadd.f32 %v191, %v274
    %vm279 = vcmp.gt.f32.partialorder %v277, 0.0
    %vm280 = vcmp.gt.f32.partialorder %v278, 0.0
    %v281 = vmul.f32 %v277, 0.2
    %v282 = vmul.f32 %v278, 0.2
    %v283 = vsel %vm279, %v277, %v281
    %v284 = vsel %vm280, %v278, %v282
    %v285 = vlaneseq
    %v286 = vshrl.u32 %v285, 7
    %v287 = vsub.s32 0, %v286
    %v288 = vrot.slane %v77, %v287
    %291 = vbcast.lane.b32.xlu0 %v288, 256
    %v292 = vpop.permute.xlu0 %291
    %v294 = vadd.f32 %v283, %v292
    %v295 = vadd.f32 %v284, %v292
    %v296 = vsub.f32 %v294, %v251
    %v297 = vsub.f32 %v295, %v254
    %v298 = vmul.f32 %v296, 1.442695
    %v299 = vpow.pop %v298
    %v300 = vmul.f32 %v297, 1.442695
    %v301 = vpow.pop %v300
    %v302 = vsub.f32 %v180, %v182
    %v303 = vsub.f32 %v186, %v188
    %305 = vset.pattern.permute.xlu0 126
    %306 = vperm.xlu0 %305, %v299
    %v307 = vpop.permute.xlu0 %306
    %310 = vset.pattern.permute.xlu0 126
    %311 = vperm.xlu0 %310, %v301
    %v312 = vpop.permute.xlu0 %311
    %v314 = vmul.f32 %v307, %v302
    %v315 = vmul.f32 %v312, %v303
    %v317 = vsel %vm248, %v258, 0
    %319 = vmatprep.subr.mxu0 0.0
    %320 = vmatpush1.msra.mxu0 %v182
    %321 = vmatprep.subr.mxu0 0.0
    %322 = vmatpush1.msra.mxu0 0.0
    %323 = vmatprep.subr.mxu0 0.0
    %324 = vmatpush1.msra.mxu0 0.0
    %325 = vmatprep.subr.mxu0 0.0
    %326 = vmatpush1.msra.mxu0 0.0
    %327 = vmatprep.subr.mxu0 0.0
    %328 = vmatpush1.msra.mxu0 0.0
    %329 = vmatprep.subr.mxu0 0.0
    %330 = vmatpush1.msra.mxu0 0.0
    %331 = vmatprep.subr.mxu0 0.0
    %332 = vmatpush1.msra.mxu0 0.0
    %333 = vmatprep.subr.mxu0 0.0
    %334 = vmatpush1.msra.mxu0 0.0
    %335 = vmatprep.subr.mxu0 0.0
    %336 = vmatpush1.msra.mxu0 0.0
    %337 = vmatprep.subr.mxu0 0.0
    %338 = vmatpush1.msra.mxu0 0.0
    %339 = vmatprep.subr.mxu0 0.0
    %340 = vmatpush1.msra.mxu0 0.0
    %341 = vmatprep.subr.mxu0 0.0
    %342 = vmatpush1.msra.mxu0 0.0
    %343 = vmatprep.subr.mxu0 0.0
    %344 = vmatpush1.msra.mxu0 0.0
    %345 = vmatprep.subr.mxu0 0.0
    %346 = vmatpush1.msra.mxu0 0.0
    %347 = vmatprep.subr.mxu0 0.0
    %348 = vmatpush1.msra.mxu0 0.0
    %349 = vmatprep.subr.mxu0 0.0
    %350 = vmatpush1.msra.mxu0 0.0
    %351 = vmatprep.subr.mxu0 0.0
    %352 = vmatpush1.msra.mxu0 0.0
    %353 = vmatprep.subr.mxu0 0.0
    %354 = vmatpush1.msra.mxu0 0.0
    %355 = vmatprep.subr.mxu0 0.0
    %356 = vmatpush1.msra.mxu0 0.0
    %357 = vmatprep.subr.mxu0 0.0
    %358 = vmatpush1.msra.mxu0 0.0
    %359 = vmatprep.subr.mxu0 0.0
    %360 = vmatpush1.msra.mxu0 0.0
    %361 = vmatprep.subr.mxu0 0.0
    %362 = vmatpush1.msra.mxu0 0.0
    %363 = vmatprep.subr.mxu0 0.0
    %364 = vmatpush1.msra.mxu0 0.0
    %365 = vmatprep.subr.mxu0 0.0
    %366 = vmatpush1.msra.mxu0 0.0
    %367 = vmatprep.subr.mxu0 0.0
    %368 = vmatpush1.msra.mxu0 0.0
    %369 = vmatprep.subr.mxu0 0.0
    %370 = vmatpush1.msra.mxu0 0.0
    %371 = vmatprep.subr.mxu0 0.0
    %372 = vmatpush1.msra.mxu0 0.0
    %373 = vmatprep.subr.mxu0 0.0
    %374 = vmatpush1.msra.mxu0 0.0
    %375 = vmatprep.subr.mxu0 0.0
    %376 = vmatpush1.msra.mxu0 0.0
    %377 = vmatprep.subr.mxu0 0.0
    %378 = vmatpush1.msra.mxu0 0.0
    %379 = vmatprep.subr.mxu0 0.0
    %380 = vmatpush1.msra.mxu0 0.0
    %381 = vmatprep.subr.mxu0 0.0
    %382 = vmatpush1.msra.mxu0 0.0
    %383 = vmatprep.mubr.f32.mxu0 0.0
    %384 = vmatmul.mubr.f32.gmra.mrb[0].mxu0 %v317
    %v385 = vpop.f32.mrb[0].mxu0
    %v386 = vadd.f32 %v314, %v385
    %v387 = vpop.f32.mrb[0].mxu0
    %388 = vdwg.mxu0
    %v390 = vsel %vm248, %v260, 0
    %392 = vmatprep.subr.mxu0 0.0
    %393 = vmatpush1.msra.mxu0 %v188
    %394 = vmatprep.subr.mxu0 0.0
    %395 = vmatpush1.msra.mxu0 0.0
    %396 = vmatprep.subr.mxu0 0.0
    %397 = vmatpush1.msra.mxu0 0.0
    %398 = vmatprep.subr.mxu0 0.0
    %399 = vmatpush1.msra.mxu0 0.0
    %400 = vmatprep.subr.mxu0 0.0
    %401 = vmatpush1.msra.mxu0 0.0
    %402 = vmatprep.subr.mxu0 0.0
    %403 = vmatpush1.msra.mxu0 0.0
    %404 = vmatprep.subr.mxu0 0.0
    %405 = vmatpush1.msra.mxu0 0.0
    %406 = vmatprep.subr.mxu0 0.0
    %407 = vmatpush1.msra.mxu0 0.0
    %408 = vmatprep.subr.mxu0 0.0
    %409 = vmatpush1.msra.mxu0 0.0
    %410 = vmatprep.subr.mxu0 0.0
    %411 = vmatpush1.msra.mxu0 0.0
    %412 = vmatprep.subr.mxu0 0.0
    %413 = vmatpush1.msra.mxu0 0.0
    %414 = vmatprep.subr.mxu0 0.0
    %415 = vmatpush1.msra.mxu0 0.0
    %416 = vmatprep.subr.mxu0 0.0
    %417 = vmatpush1.msra.mxu0 0.0
    %418 = vmatprep.subr.mxu0 0.0
    %419 = vmatpush1.msra.mxu0 0.0
    %420 = vmatprep.subr.mxu0 0.0
    %421 = vmatpush1.msra.mxu0 0.0
    %422 = vmatprep.subr.mxu0 0.0
    %423 = vmatpush1.msra.mxu0 0.0
    %424 = vmatprep.subr.mxu0 0.0
    %425 = vmatpush1.msra.mxu0 0.0
    %426 = vmatprep.subr.mxu0 0.0
    %427 = vmatpush1.msra.mxu0 0.0
    %428 = vmatprep.subr.mxu0 0.0
    %429 = vmatpush1.msra.mxu0 0.0
    %430 = vmatprep.subr.mxu0 0.0
    %431 = vmatpush1.msra.mxu0 0.0
    %432 = vmatprep.subr.mxu0 0.0
    %433 = vmatpush1.msra.mxu0 0.0
    %434 = vmatprep.subr.mxu0 0.0
    %435 = vmatpush1.msra.mxu0 0.0
    %436 = vmatprep.subr.mxu0 0.0
    %437 = vmatpush1.msra.mxu0 0.0
    %438 = vmatprep.subr.mxu0 0.0
    %439 = vmatpush1.msra.mxu0 0.0
    %440 = vmatprep.subr.mxu0 0.0
    %441 = vmatpush1.msra.mxu0 0.0
    %442 = vmatprep.subr.mxu0 0.0
    %443 = vmatpush1.msra.mxu0 0.0
    %444 = vmatprep.subr.mxu0 0.0
    %445 = vmatpush1.msra.mxu0 0.0
    %446 = vmatprep.subr.mxu0 0.0
    %447 = vmatpush1.msra.mxu0 0.0
    %448 = vmatprep.subr.mxu0 0.0
    %449 = vmatpush1.msra.mxu0 0.0
    %450 = vmatprep.subr.mxu0 0.0
    %451 = vmatpush1.msra.mxu0 0.0
    %452 = vmatprep.subr.mxu0 0.0
    %453 = vmatpush1.msra.mxu0 0.0
    %454 = vmatprep.subr.mxu0 0.0
    %455 = vmatpush1.msra.mxu0 0.0
    %456 = vmatprep.mubr.f32.mxu0 0.0
    %457 = vmatmul.mubr.f32.gmra.mrb[0].mxu0 %v390
    %v458 = vpop.f32.mrb[0].mxu0
    %v459 = vadd.f32 %v315, %v458
    %v460 = vpop.f32.mrb[0].mxu0
    %461 = vdwg.mxu0
    %v462 = vmul.f32 %v268, %v386
    %v463 = vmul.f32 %v270, %v459
    %v464 = vlaneseq
    %v465 = vshrl.u32 %v464, 7
    %v466 = vsub.s32 0, %v465
    %v467 = vrot.slane %v110, %v466
    %v468 = vadd.f32 %v462, %v467
    %v469 = vadd.f32 %v463, %v467
    %v470 = vadd.f32 %v468, %v469
    %v471 = vrot.slane %v470, 4
    %v472 = vadd.f32 %v470, %v471
    %v473 = vrot.slane %v472, 2
    %v474 = vadd.f32 %v472, %v473
    %v475 = vrot.slane %v474, 1
    %v476 = vadd.f32 %v474, %v475
    %v477 = vrcp.pop 16.0
    %v478 = vmul.f32 %v476, %v477
    %v479 = vsub.f32 %v468, %v478
    %v480 = vsub.f32 %v469, %v478
    %v481 = vmul.f32 %v479, %v479
    %v482 = vmul.f32 %v480, %v480
    %v483 = vadd.f32 %v481, %v482
    %v484 = vrot.slane %v483, 4
    %v485 = vadd.f32 %v483, %v484
    %v486 = vrot.slane %v485, 2
    %v487 = vadd.f32 %v485, %v486
    %v488 = vrot.slane %v487, 1
    %v489 = vadd.f32 %v487, %v488
    %v490 = vmul.f32 %v489, %v477
    %v491 = vadd.f32 %v490, 1e-05
    %v492 = vrsqrt.pop %v491
    %v493 = vmul.f32 %v111, %v492
    %v494 = vlaneseq
    %v495 = vshrl.u32 %v494, 7
    %v496 = vsub.s32 0, %v495
    %v497 = vrot.slane %v493, %v496
    %v498 = vmul.f32 %v479, %v497
    %v499 = vmul.f32 %v480, %v497
    %v500 = vlaneseq
    %v501 = vshrl.u32 %v500, 7
    %v502 = vsub.s32 0, %v501
    %v503 = vrot.slane %v112, %v502
    %v504 = vadd.f32 %v498, %v503
    %v505 = vadd.f32 %v499, %v503
    %v506 = vmax.f32 %v504, 0.0
    %v507 = vmax.f32 %v505, 0.0
    %v508 = vld [vmem:[#allocation8] sm:$0xff]
    %v509 = vld [vmem:[#allocation8 + $0x8] sm:$0xff]
    %v510 = vld [vmem:[#allocation8 + $0x10] sm:$0xff]
    %v511 = vld [vmem:[#allocation8 + $0x18] sm:$0xff]
    %v512 = vld [vmem:[#allocation8 + $0x20] sm:$0xff]
    %v513 = vld [vmem:[#allocation8 + $0x28] sm:$0xff]
    %v514 = vld [vmem:[#allocation8 + $0x30] sm:$0xff]
    %v515 = vld [vmem:[#allocation8 + $0x38] sm:$0xff]
    %v516 = vld [vmem:[#allocation8 + $0x40] sm:$0xff]
    %v517 = vld [vmem:[#allocation8 + $0x48] sm:$0xff]
    %v518 = vld [vmem:[#allocation8 + $0x50] sm:$0xff]
    %v519 = vld [vmem:[#allocation8 + $0x58] sm:$0xff]
    %v520 = vld [vmem:[#allocation8 + $0x60] sm:$0xff]
    %v521 = vld [vmem:[#allocation8 + $0x68] sm:$0xff]
    %v522 = vld [vmem:[#allocation8 + $0x70] sm:$0xff]
    %v523 = vld [vmem:[#allocation8 + $0x78] sm:$0xff]
    %v524 = vld [vmem:[#allocation8 + $0x80] sm:$0xff]
    %v525 = vld [vmem:[#allocation8 + $0x88] sm:$0xff]
    %v526 = vld [vmem:[#allocation8 + $0x90] sm:$0xff]
    %v527 = vld [vmem:[#allocation8 + $0x98] sm:$0xff]
    %v528 = vld [vmem:[#allocation8 + $0xa0] sm:$0xff]
    %v529 = vld [vmem:[#allocation8 + $0xa8] sm:$0xff]
    %v530 = vld [vmem:[#allocation8 + $0xb0] sm:$0xff]
    %v531 = vld [vmem:[#allocation8 + $0xb8] sm:$0xff]
    %v532 = vld [vmem:[#allocation8 + $0xc0] sm:$0xff]
    %v533 = vld [vmem:[#allocation8 + $0xc8] sm:$0xff]
    %v534 = vld [vmem:[#allocation8 + $0xd0] sm:$0xff]
    %v535 = vld [vmem:[#allocation8 + $0xd8] sm:$0xff]
    %v536 = vld [vmem:[#allocation8 + $0xe0] sm:$0xff]
    %v537 = vld [vmem:[#allocation8 + $0xe8] sm:$0xff]
    %v538 = vld [vmem:[#allocation8 + $0xf0] sm:$0xff]
    %v539 = vld [vmem:[#allocation8 + $0xf8] sm:$0xff]
    %v540 = vld [vmem:[%s4 + $0x3] sm:$0x1]
    %v541 = vld [vmem:[%s4 + $0x4] sm:$0x1]
    %v542 = vld [vmem:[%s4 + $0x5] sm:$0x1]
    %543 = vmatprep.subr.mxu0 %v509
    %544 = vmatpush1.msra.mxu0 %v508
    %545 = vmatprep.subr.mxu0 %v511
    %546 = vmatpush1.msra.mxu0 %v510
    %547 = vmatprep.subr.mxu0 %v513
    %548 = vmatpush1.msra.mxu0 %v512
    %549 = vmatprep.subr.mxu0 %v515
    %550 = vmatpush1.msra.mxu0 %v514
    %551 = vmatprep.subr.mxu0 %v517
    %552 = vmatpush1.msra.mxu0 %v516
    %553 = vmatprep.subr.mxu0 %v519
    %554 = vmatpush1.msra.mxu0 %v518
    %555 = vmatprep.subr.mxu0 %v521
    %556 = vmatpush1.msra.mxu0 %v520
    %557 = vmatprep.subr.mxu0 %v523
    %558 = vmatpush1.msra.mxu0 %v522
    %559 = vmatprep.subr.mxu0 %v525
    %560 = vmatpush1.msra.mxu0 %v524
    %561 = vmatprep.subr.mxu0 %v527
    %562 = vmatpush1.msra.mxu0 %v526
    %563 = vmatprep.subr.mxu0 %v529
    %564 = vmatpush1.msra.mxu0 %v528
    %565 = vmatprep.subr.mxu0 %v531
    %566 = vmatpush1.msra.mxu0 %v530
    %567 = vmatprep.subr.mxu0 %v533
    %568 = vmatpush1.msra.mxu0 %v532
    %569 = vmatprep.subr.mxu0 %v535
    %570 = vmatpush1.msra.mxu0 %v534
    %571 = vmatprep.subr.mxu0 %v537
    %572 = vmatpush1.msra.mxu0 %v536
    %573 = vmatprep.subr.mxu0 %v539
    %574 = vmatpush1.msra.mxu0 %v538
    %575 = vmatprep.subr.mxu0 0.0
    %576 = vmatpush1.msra.mxu0 0.0
    %577 = vmatprep.subr.mxu0 0.0
    %578 = vmatpush1.msra.mxu0 0.0
    %579 = vmatprep.subr.mxu0 0.0
    %580 = vmatpush1.msra.mxu0 0.0
    %581 = vmatprep.subr.mxu0 0.0
    %582 = vmatpush1.msra.mxu0 0.0
    %583 = vmatprep.subr.mxu0 0.0
    %584 = vmatpush1.msra.mxu0 0.0
    %585 = vmatprep.subr.mxu0 0.0
    %586 = vmatpush1.msra.mxu0 0.0
    %587 = vmatprep.subr.mxu0 0.0
    %588 = vmatpush1.msra.mxu0 0.0
    %589 = vmatprep.subr.mxu0 0.0
    %590 = vmatpush1.msra.mxu0 0.0
    %591 = vmatprep.subr.mxu0 0.0
    %592 = vmatpush1.msra.mxu0 0.0
    %593 = vmatprep.subr.mxu0 0.0
    %594 = vmatpush1.msra.mxu0 0.0
    %595 = vmatprep.subr.mxu0 0.0
    %596 = vmatpush1.msra.mxu0 0.0
    %597 = vmatprep.subr.mxu0 0.0
    %598 = vmatpush1.msra.mxu0 0.0
    %599 = vmatprep.subr.mxu0 0.0
    %600 = vmatpush1.msra.mxu0 0.0
    %601 = vmatprep.subr.mxu0 0.0
    %602 = vmatpush1.msra.mxu0 0.0
    %603 = vmatprep.subr.mxu0 0.0
    %604 = vmatpush1.msra.mxu0 0.0
    %605 = vmatprep.subr.mxu0 0.0
    %606 = vmatpush1.msra.mxu0 0.0
    %607 = vmatprep.mubr.f32.mxu0 0.0
    %608 = vmatmul.mubr.f32.gmra.mrb[0].mxu0 %v506
    %v609 = vpop.f32.mrb[0].mxu0
    %v610 = vadd.f32 0.0, %v609
    %v611 = vpop.f32.mrb[0].mxu0
    %v612 = vadd.f32 0.0, %v611
    %613 = vmatprep.mubr.f32.mxu0 0.0
    %614 = vmatmul.mubr.f32.gmra.mrb[0].mxu0 %v507
    %v615 = vpop.f32.mrb[0].mxu0
    %v616 = vadd.f32 0.0, %v615
    %v617 = vpop.f32.mrb[0].mxu0
    %v618 = vadd.f32 0.0, %v617
    %619 = vdwg.mxu0
    %v620 = vadd.f32 %v612, 0.0
    %v621 = vadd.f32 %v618, 0.0
    %623 = vset.pattern.permute.xlu0 126
    %624 = vperm.xlu0 %623, %v620
    %v625 = vpop.permute.xlu0 %624
    %628 = vset.pattern.permute.xlu0 126
    %629 = vperm.xlu0 %628, %v621
    %v630 = vpop.permute.xlu0 %629
    %632 = vset.pattern.permute.xlu0 127
    %633 = vperm.xlu0 %632, %v620
    %v634 = vpop.permute.xlu0 %633
    %635 = vset.pattern.permute.xlu0 127
    %636 = vperm.xlu0 %635, %v621
    %v637 = vpop.permute.xlu0 %636
    %v638 = vlaneseq
    %v639 = vshrl.u32 %v638, 7
    %v640 = vsub.s32 %v209, %v639
    %v641 = vrot.slane %v634, %v640
    %v642 = vlaneseq
    %v643 = vshrl.u32 %v642, 7
    %v644 = vsub.s32 %v209, %v643
    %v645 = vrot.slane %v637, %v644
    %v646 = vsel %vm218, %v641, %v641
    %v647 = vsel %vm220, %v641, %v646
    %v648 = vsel %vm222, %v641, %v647
    %v649 = vsel %vm224, %v641, %v648
    %v650 = vsel %vm226, %v641, %v649
    %v651 = vsel %vm228, %v641, %v650
    %v652 = vsel %vm218, %v645, %v645
    %v653 = vsel %vm220, %v645, %v652
    %v654 = vsel %vm222, %v645, %v653
    %v655 = vsel %vm224, %v645, %v654
    %v656 = vsel %vm226, %v645, %v655
    %v657 = vsel %vm228, %v645, %v656
    %v660 = vadd.f32 %v625, %v651
    %v661 = vadd.f32 %v630, %v657
    %vm662 = vcmp.gt.f32.partialorder %v660, 0.0
    %vm663 = vcmp.gt.f32.partialorder %v661, 0.0
    %v664 = vmul.f32 %v660, 0.2
    %v665 = vmul.f32 %v661, 0.2
    %v666 = vsel %vm662, %v660, %v664
    %v667 = vsel %vm663, %v661, %v665
    %v668 = vadd.f32 %v666, %v76
    %v669 = vadd.f32 %v667, %v76
    %v670 = vsel %vm248, %v668, -inf
    %671 = vmax.xlane.f32.xlu0 %v670
    %v672 = vpop.xlane.xlu0 %671
    %v673 = vsel %vm248, %v669, -inf
    %674 = vmax.xlane.f32.xlu0 %v673
    %v675 = vpop.xlane.xlu0 %674
    %v676 = vsub.f32 %v668, %v672
    %v677 = vsub.f32 %v669, %v675
    %v678 = vmul.f32 %v676, 1.442695
    %v679 = vpow.pop %v678
    %v680 = vmul.f32 %v677, 1.442695
    %v681 = vpow.pop %v680
    %v682 = vsel %vm248, %v679, 0.0
    %683 = vadd.xlane.f32.xlu0 %v682
    %v684 = vpop.xlane.xlu0 %683
    %v685 = vsel %vm248, %v681, 0.0
    %686 = vadd.xlane.f32.xlu0 %v685
    %v687 = vpop.xlane.xlu0 %686
    %v688 = vrcp.pop %v684
    %v689 = vmul.f32 1.0, %v688
    %v690 = vrcp.pop %v687
    %v691 = vmul.f32 1.0, %v690
    %692 = vrot.lane.b32.xlu0 %v620, 127
    %v693 = vpop.permute.xlu0 %692
    %694 = vrot.lane.b32.xlu0 %v621, 127
    %v695 = vpop.permute.xlu0 %694
    %v698 = vadd.f32 %v620, %v693
    %v699 = vadd.f32 %v621, %v695
    %vm700 = vcmp.gt.f32.partialorder %v698, 0.0
    %vm701 = vcmp.gt.f32.partialorder %v699, 0.0
    %v702 = vmul.f32 %v698, 0.2
    %v703 = vmul.f32 %v699, 0.2
    %v704 = vsel %vm700, %v698, %v702
    %v705 = vsel %vm701, %v699, %v703
    %v706 = vadd.f32 %v704, %v292
    %v707 = vadd.f32 %v705, %v292
    %v708 = vsub.f32 %v706, %v672
    %v709 = vsub.f32 %v707, %v675
    %v710 = vmul.f32 %v708, 1.442695
    %v711 = vpow.pop %v710
    %v712 = vmul.f32 %v709, 1.442695
    %v713 = vpow.pop %v712
    %v714 = vsub.f32 %v610, %v612
    %v715 = vsub.f32 %v616, %v618
    %717 = vset.pattern.permute.xlu0 126
    %718 = vperm.xlu0 %717, %v711
    %v719 = vpop.permute.xlu0 %718
    %722 = vset.pattern.permute.xlu0 126
    %723 = vperm.xlu0 %722, %v713
    %v724 = vpop.permute.xlu0 %723
    %v726 = vmul.f32 %v719, %v714
    %v727 = vmul.f32 %v724, %v715
    %v729 = vsel %vm248, %v679, 0
    %731 = vmatprep.subr.mxu0 0.0
    %732 = vmatpush1.msra.mxu0 %v612
    %733 = vmatprep.subr.mxu0 0.0
    %734 = vmatpush1.msra.mxu0 0.0
    %735 = vmatprep.subr.mxu0 0.0
    %736 = vmatpush1.msra.mxu0 0.0
    %737 = vmatprep.subr.mxu0 0.0
    %738 = vmatpush1.msra.mxu0 0.0
    %739 = vmatprep.subr.mxu0 0.0
    %740 = vmatpush1.msra.mxu0 0.0
    %741 = vmatprep.subr.mxu0 0.0
    %742 = vmatpush1.msra.mxu0 0.0
    %743 = vmatprep.subr.mxu0 0.0
    %744 = vmatpush1.msra.mxu0 0.0
    %745 = vmatprep.subr.mxu0 0.0
    %746 = vmatpush1.msra.mxu0 0.0
    %747 = vmatprep.subr.mxu0 0.0
    %748 = vmatpush1.msra.mxu0 0.0
    %749 = vmatprep.subr.mxu0 0.0
    %750 = vmatpush1.msra.mxu0 0.0
    %751 = vmatprep.subr.mxu0 0.0
    %752 = vmatpush1.msra.mxu0 0.0
    %753 = vmatprep.subr.mxu0 0.0
    %754 = vmatpush1.msra.mxu0 0.0
    %755 = vmatprep.subr.mxu0 0.0
    %756 = vmatpush1.msra.mxu0 0.0
    %757 = vmatprep.subr.mxu0 0.0
    %758 = vmatpush1.msra.mxu0 0.0
    %759 = vmatprep.subr.mxu0 0.0
    %760 = vmatpush1.msra.mxu0 0.0
    %761 = vmatprep.subr.mxu0 0.0
    %762 = vmatpush1.msra.mxu0 0.0
    %763 = vmatprep.subr.mxu0 0.0
    %764 = vmatpush1.msra.mxu0 0.0
    %765 = vmatprep.subr.mxu0 0.0
    %766 = vmatpush1.msra.mxu0 0.0
    %767 = vmatprep.subr.mxu0 0.0
    %768 = vmatpush1.msra.mxu0 0.0
    %769 = vmatprep.subr.mxu0 0.0
    %770 = vmatpush1.msra.mxu0 0.0
    %771 = vmatprep.subr.mxu0 0.0
    %772 = vmatpush1.msra.mxu0 0.0
    %773 = vmatprep.subr.mxu0 0.0
    %774 = vmatpush1.msra.mxu0 0.0
    %775 = vmatprep.subr.mxu0 0.0
    %776 = vmatpush1.msra.mxu0 0.0
    %777 = vmatprep.subr.mxu0 0.0
    %778 = vmatpush1.msra.mxu0 0.0
    %779 = vmatprep.subr.mxu0 0.0
    %780 = vmatpush1.msra.mxu0 0.0
    %781 = vmatprep.subr.mxu0 0.0
    %782 = vmatpush1.msra.mxu0 0.0
    %783 = vmatprep.subr.mxu0 0.0
    %784 = vmatpush1.msra.mxu0 0.0
    %785 = vmatprep.subr.mxu0 0.0
    %786 = vmatpush1.msra.mxu0 0.0
    %787 = vmatprep.subr.mxu0 0.0
    %788 = vmatpush1.msra.mxu0 0.0
    %789 = vmatprep.subr.mxu0 0.0
    %790 = vmatpush1.msra.mxu0 0.0
    %791 = vmatprep.subr.mxu0 0.0
    %792 = vmatpush1.msra.mxu0 0.0
    %793 = vmatprep.subr.mxu0 0.0
    %794 = vmatpush1.msra.mxu0 0.0
    %795 = vmatprep.mubr.f32.mxu0 0.0
    %796 = vmatmul.mubr.f32.gmra.mrb[0].mxu0 %v729
    %v797 = vpop.f32.mrb[0].mxu0
    %v798 = vadd.f32 %v726, %v797
    %v799 = vpop.f32.mrb[0].mxu0
    %800 = vdwg.mxu0
    %v802 = vsel %vm248, %v681, 0
    %804 = vmatprep.subr.mxu0 0.0
    %805 = vmatpush1.msra.mxu0 %v618
    %806 = vmatprep.subr.mxu0 0.0
    %807 = vmatpush1.msra.mxu0 0.0
    %808 = vmatprep.subr.mxu0 0.0
    %809 = vmatpush1.msra.mxu0 0.0
    %810 = vmatprep.subr.mxu0 0.0
    %811 = vmatpush1.msra.mxu0 0.0
    %812 = vmatprep.subr.mxu0 0.0
    %813 = vmatpush1.msra.mxu0 0.0
    %814 = vmatprep.subr.mxu0 0.0
    %815 = vmatpush1.msra.mxu0 0.0
    %816 = vmatprep.subr.mxu0 0.0
    %817 = vmatpush1.msra.mxu0 0.0
    %818 = vmatprep.subr.mxu0 0.0
    %819 = vmatpush1.msra.mxu0 0.0
    %820 = vmatprep.subr.mxu0 0.0
    %821 = vmatpush1.msra.mxu0 0.0
    %822 = vmatprep.subr.mxu0 0.0
    %823 = vmatpush1.msra.mxu0 0.0
    %824 = vmatprep.subr.mxu0 0.0
    %825 = vmatpush1.msra.mxu0 0.0
    %826 = vmatprep.subr.mxu0 0.0
    %827 = vmatpush1.msra.mxu0 0.0
    %828 = vmatprep.subr.mxu0 0.0
    %829 = vmatpush1.msra.mxu0 0.0
    %830 = vmatprep.subr.mxu0 0.0
    %831 = vmatpush1.msra.mxu0 0.0
    %832 = vmatprep.subr.mxu0 0.0
    %833 = vmatpush1.msra.mxu0 0.0
    %834 = vmatprep.subr.mxu0 0.0
    %835 = vmatpush1.msra.mxu0 0.0
    %836 = vmatprep.subr.mxu0 0.0
    %837 = vmatpush1.msra.mxu0 0.0
    %838 = vmatprep.subr.mxu0 0.0
    %839 = vmatpush1.msra.mxu0 0.0
    %840 = vmatprep.subr.mxu0 0.0
    %841 = vmatpush1.msra.mxu0 0.0
    %842 = vmatprep.subr.mxu0 0.0
    %843 = vmatpush1.msra.mxu0 0.0
    %844 = vmatprep.subr.mxu0 0.0
    %845 = vmatpush1.msra.mxu0 0.0
    %846 = vmatprep.subr.mxu0 0.0
    %847 = vmatpush1.msra.mxu0 0.0
    %848 = vmatprep.subr.mxu0 0.0
    %849 = vmatpush1.msra.mxu0 0.0
    %850 = vmatprep.subr.mxu0 0.0
    %851 = vmatpush1.msra.mxu0 0.0
    %852 = vmatprep.subr.mxu0 0.0
    %853 = vmatpush1.msra.mxu0 0.0
    %854 = vmatprep.subr.mxu0 0.0
    %855 = vmatpush1.msra.mxu0 0.0
    %856 = vmatprep.subr.mxu0 0.0
    %857 = vmatpush1.msra.mxu0 0.0
    %858 = vmatprep.subr.mxu0 0.0
    %859 = vmatpush1.msra.mxu0 0.0
    %860 = vmatprep.subr.mxu0 0.0
    %861 = vmatpush1.msra.mxu0 0.0
    %862 = vmatprep.subr.mxu0 0.0
    %863 = vmatpush1.msra.mxu0 0.0
    %864 = vmatprep.subr.mxu0 0.0
    %865 = vmatpush1.msra.mxu0 0.0
    %866 = vmatprep.subr.mxu0 0.0
    %867 = vmatpush1.msra.mxu0 0.0
    %868 = vmatprep.mubr.f32.mxu0 0.0
    %869 = vmatmul.mubr.f32.gmra.mrb[0].mxu0 %v802
    %v870 = vpop.f32.mrb[0].mxu0
    %v871 = vadd.f32 %v727, %v870
    %v872 = vpop.f32.mrb[0].mxu0
    %873 = vdwg.mxu0
    %v874 = vmul.f32 %v689, %v798
    %v875 = vmul.f32 %v691, %v871
    %v876 = vlaneseq
    %v877 = vshrl.u32 %v876, 7
    %v878 = vsub.s32 0, %v877
    %v879 = vrot.slane %v540, %v878
    %v880 = vadd.f32 %v874, %v879
    %v881 = vadd.f32 %v875, %v879
    %v882 = vadd.f32 %v880, %v881
    %v883 = vrot.slane %v882, 4
    %v884 = vadd.f32 %v882, %v883
    %v885 = vrot.slane %v884, 2
    %v886 = vadd.f32 %v884, %v885
    %v887 = vrot.slane %v886, 1
    %v888 = vadd.f32 %v886, %v887
    %v889 = vmul.f32 %v888, %v477
    %v890 = vsub.f32 %v880, %v889
    %v891 = vsub.f32 %v881, %v889
    %v892 = vmul.f32 %v890, %v890
    %v893 = vmul.f32 %v891, %v891
    %v894 = vadd.f32 %v892, %v893
    %v895 = vrot.slane %v894, 4
    %v896 = vadd.f32 %v894, %v895
    %v897 = vrot.slane %v896, 2
    %v898 = vadd.f32 %v896, %v897
    %v899 = vrot.slane %v898, 1
    %v900 = vadd.f32 %v898, %v899
    %v901 = vmul.f32 %v900, %v477
    %v902 = vadd.f32 %v901, 1e-05
    %v903 = vrsqrt.pop %v902
    %v904 = vmul.f32 %v541, %v903
    %v905 = vlaneseq
    %v906 = vshrl.u32 %v905, 7
    %v907 = vsub.s32 0, %v906
    %v908 = vrot.slane %v904, %v907
    %v909 = vmul.f32 %v890, %v908
    %v910 = vmul.f32 %v891, %v908
    %v911 = vlaneseq
    %v912 = vshrl.u32 %v911, 7
    %v913 = vsub.s32 0, %v912
    %v914 = vrot.slane %v542, %v913
    %v915 = vadd.f32 %v909, %v914
    %v916 = vadd.f32 %v910, %v914
    %v917 = vmax.f32 %v915, 0.0
    %v918 = vmax.f32 %v916, 0.0
    %v919 = vadd.f32 %v917, %v74
    %v920 = vadd.f32 %v918, %v75
    %921 = vst [vmem:[#allocation10] sm:$0xff] %v919
    %922 = vst [vmem:[#allocation10 + $0x8] sm:$0xff] %v920
    // Predicated region
    $region38: #{tpu_custom_call.1} parent=1 // pred_check
      _
    $region39: #{tpu_custom_call.1} parent=1 // pred_check_branch
      %924 = sbr.rel (0) target = $region41
    $region40: #{tpu_custom_call.1} parent=1 // pred_region
      %s926 = ssub.s32 256, 256
      %927 = vsyncadd [#allocation4], %s926
      %s928 = sshll.u32 [#allocation10], 4
      %s929 = int_to_ptr.vmem [resolvable:$true] %s928
      %934 = dma.vmem_to_hbm [thread:$0]  %s929, 256, %s5, [#allocation4], 128, 128, 8
    $region41: #{tpu_custom_call.1} parent=1 // pred_fallthru
      _
    // Predicated region
    $region42: #{tpu_custom_call.1} parent=1 // pred_check
      _
    $region43: #{tpu_custom_call.1} parent=1 // pred_check_branch
      %936 = sbr.rel (0) target = $region45
    $region44: #{tpu_custom_call.1} parent=1 // pred_region
      %937 = dma.done [#allocation4], 256
    $region45: #{tpu_custom_call.1} parent=1 // pred_fallthru
      _
    %938 = vsyncpa [#allocation3], 1
    %939 = vsyncpa [#allocation6], 1
    %940 = vsyncpa [#allocation9], 1
    %941 = vsyncpa [#allocation4], 1

</llo_original>
